<compile_context>
chip_gen: v5e
topology: v5e:2x2
jax: 0.10.0
libtpu: 0.0.40
codegen_flags: <defaults>
</compile_context>

<pallas_src>
import functools

import jax
import jax.numpy as jnp
from jax.experimental import pallas as pl
from jax.experimental.pallas import tpu as pltpu


def _tconv_disjoint_kernel(x_ref, w_ref, b_ref, o_ref, *, K, S, Cout, HW):
    """Fast path, K <= S: every tap owns its own output phase -> direct writes.

    x_ref: (1, Cin, HW)   w_ref: (K*K*Cout, Cin)   b_ref: (Cout, 1)
    o_ref: (1, S, S, Cout, HW)
    """
    # One fused MXU matmul for all K*K taps; f32 accumulation on the MXU.
    y = jnp.dot(w_ref[...], x_ref[0], preferred_element_type=jnp.float32)
    b = b_ref[...]                                      # (Cout, 1), lane-broadcasts

    bias_slab = None
    if K < S:                                           # phases with no tap: bias only
        bias_slab = jnp.broadcast_to(b, (Cout, HW)).astype(o_ref.dtype)

    for rh in range(S):                                 # static, small loops
        for rw in range(S):
            if rh < K and rw < K:
                c0 = (rh * K + rw) * Cout               # sublane-aligned row slice
                o_ref[0, rh, rw] = (y[c0:c0 + Cout, :] + b).astype(o_ref.dtype)
            else:
                o_ref[0, rh, rw] = bias_slab


def _tconv_general_kernel(x_ref, w_ref, b_ref, o_ref, acc_ref, *, K, S, Cout, Wp, HWp):
    """General path, K > S: overlapping taps -> accumulate in f32 VMEM scratch.

    x is spatially zero-padded to (Hp, Wp) in the wrapper, so a tap's
    contribution inside its phase slab is just a constant flat shift
    off = (kh//S)*Wp + (kw//S) of the matmul result slab.

    x_ref: (1, Cin, HWp)   o_ref: (1, S, S, Cout, HWp)   acc_ref: (S, S, Cout, HWp) f32
    """
    y = jnp.dot(w_ref[...], x_ref[0], preferred_element_type=jnp.float32)
    # Initialise the accumulator with the broadcast bias (covers tap-less positions).
    acc_ref[...] = jnp.broadcast_to(b_ref[...], (S, S, Cout, HWp))
    for kh in range(K):
        qh, rh = divmod(kh, S)
        for kw in range(K):
            qw, rw = divmod(kw, S)
            c0 = (kh * K + kw) * Cout
            off = qh * Wp + qw
            acc_ref[rh, rw, :, off:HWp] += y[c0:c0 + Cout, 0:HWp - off]
    o_ref[0] = acc_ref[...].astype(o_ref.dtype)


def transposed_conv2d(x_nchw, weight, bias, *, stride):
    """Matches torch.nn.ConvTranspose2d(Cin, Cout, kernel_size=K, stride=S)."""
    N, Cin, H, W = x_nchw.shape
    Cin_w, Cout, K, Kw = weight.shape
    assert Cin == Cin_w and K == Kw
    S = int(stride)
    OH = (H - 1) * S + K
    OW = (W - 1) * S + K
    q = (K - 1) // S                      # how far a tap can spill past the H*S grid
    Hp, Wp = H + q, W + q
    HWp = Hp * Wp

    # Weight: (Cin, Cout, K, K) -> (K*K*Cout, Cin); row index = (kh*K + kw)*Cout + co.
    w2 = jnp.transpose(weight, (2, 3, 1, 0)).reshape(K * K * Cout, Cin)
    b2 = bias.reshape(Cout, 1).astype(jnp.float32)

    if q == 0:                            # K <= S: disjoint phases, direct writes
        x3 = x_nchw.reshape(N, Cin, HWp)  # NCHW needs no transpose, only a reshape
        kernel = functools.partial(_tconv_disjoint_kernel, K=K, S=S, Cout=Cout, HW=HWp)
        scratch_shapes = []
    else:                                 # K > S: accumulate in f32 VMEM scratch
        xp = jnp.pad(x_nchw, ((0, 0), (0, 0), (0, q), (0, q)))
        x3 = xp.reshape(N, Cin, HWp)
        kernel = functools.partial(_tconv_general_kernel, K=K, S=S, Cout=Cout, Wp=Wp, HWp=HWp)
        scratch_shapes = [pltpu.VMEM((S, S, Cout, HWp), jnp.float32)]

    out_ph = pl.pallas_call(
        kernel,
        out_shape=jax.ShapeDtypeStruct((N, S, S, Cout, HWp), x_nchw.dtype),
        grid=(N,),
        in_specs=[
            pl.BlockSpec((1, Cin, HWp), lambda n: (n, 0, 0)),
            pl.BlockSpec((K * K * Cout, Cin), lambda n: (0, 0)),
            pl.BlockSpec((Cout, 1), lambda n: (0, 0)),
        ],
        out_specs=pl.BlockSpec((1, S, S, Cout, HWp), lambda n: (n, 0, 0, 0, 0)),
        scratch_shapes=scratch_shapes,
        compiler_params=pltpu.CompilerParams(dimension_semantics=("parallel",)),
    )(x3, w2, b2)

    # Phase -> spatial interleave, fused with the NCHW transpose PyTorch expects.
    out = out_ph.reshape(N, S, S, Cout, Hp, Wp)
    out = jnp.transpose(out, (0, 3, 4, 1, 5, 2))        # (N, Cout, Hp, S, Wp, S)
    out = out.reshape(N, Cout, Hp * S, Wp * S)
    return out[:, :, :OH, :OW]


def _reference(x_nchw, weight, bias, stride):
    """Plain-JAX reference with identical ConvTranspose2d semantics."""
    N, Cin, H, W = x_nchw.shape
    _, Cout, K, _ = weight.shape
    S = int(stride)
    OH = (H - 1) * S + K
    OW = (W - 1) * S + K
    out = jnp.zeros((N, Cout, OH, OW), jnp.float32)
    for kh in range(K):
        for kw in range(K):
            contrib = jnp.einsum("nchw,cd->ndhw", x_nchw, weight[:, :, kh, kw])
            out = out.at[:, :, kh:kh + H * S:S, kw:kw + W * S:S].add(contrib)
    return out + bias[None, :, None, None]


if __name__ == "__main__":
    key = jax.random.PRNGKey(0)
    kx, kw1, kb1, kw2, kb2 = jax.random.split(key, 5)

    # Small shapes consistent with the module: batch=2, input_dim=4, spatial=16.
    N, Cin, H, W = 2, 4, 16, 16
    Cout = 8
    x = jax.random.normal(kx, (N, Cin, H, W), dtype=jnp.float32)

    # Config A: upsampling transposed conv (kernel_size=2, stride=2).
    K_a, S_a = 2, 2
    w_a = 0.1 * jax.random.normal(kw1, (Cin, Cout, K_a, K_a), dtype=jnp.float32)
    b_a = 0.1 * jax.random.normal(kb1, (Cout,), dtype=jnp.float32)
    out_a = jax.block_until_ready(transposed_conv2d(x, w_a, b_a, stride=S_a))
    ref_a = _reference(x, w_a, b_a, S_a)
    assert out_a.shape == (N, Cout, (H - 1) * S_a + K_a, (W - 1) * S_a + K_a)
    assert jnp.allclose(out_a, ref_a, atol=1e-4, rtol=1e-4)

    # Config B: module defaults (kernel_size=1, stride=1) -> 1x1 "conv".
    K_b, S_b = 1, 1
    w_b = 0.1 * jax.random.normal(kw2, (Cin, Cout, K_b, K_b), dtype=jnp.float32)
    b_b = 0.1 * jax.random.normal(kb2, (Cout,), dtype=jnp.float32)
    out_b = jax.block_until_ready(transposed_conv2d(x, w_b, b_b, stride=S_b))
    ref_b = _reference(x, w_b, b_b, S_b)
    assert out_b.shape == (N, Cout, H, W)
    assert jnp.allclose(out_b, ref_b, atol=1e-4, rtol=1e-4)

    print("KERNEL_OK")
</pallas_src>

<mosaic_0001>
module attributes {stable_mosaic.version = 11 : i64} {
  func.func @_tconv_disjoint_kernel(%arg0: i32, %arg1: memref<1x4x256xf32, #tpu.memory_space<vmem>>, %arg2: memref<32x4xf32, #tpu.memory_space<vmem>>, %arg3: memref<8x1xf32, #tpu.memory_space<vmem>>, %arg4: memref<1x2x2x8x256xf32, #tpu.memory_space<vmem>>) attributes {dimension_semantics = [#tpu.dimension_semantics<parallel>], iteration_bounds = array<i64: 2>, scalar_prefetch = 0 : i64, scratch_operands = 0 : i64, tpu.core_type = #tpu.core_type<tc>, window_params = [{transform_indices = @transform_0, window_bounds = array<i64: 1, 4, 256>}, {pipeline_mode = #tpu.pipeline_mode<synchronous>, transform_indices = @transform_1, window_bounds = array<i64: 32, 4>}, {pipeline_mode = #tpu.pipeline_mode<synchronous>, transform_indices = @transform_2, window_bounds = array<i64: 8, 1>}, {transform_indices = @transform_3, window_bounds = array<i64: 1, 2, 2, 8, 256>}]} {
    %c0 = arith.constant 0 : index
    %c0_0 = arith.constant 0 : index
    %0 = vector.load %arg2[%c0, %c0_0] : memref<32x4xf32, #tpu.memory_space<vmem>>, vector<32x4xf32>
    %c0_1 = arith.constant 0 : index
    %c0_2 = arith.constant 0 : index
    %c0_3 = arith.constant 0 : index
    %1 = vector.load %arg1[%c0_1, %c0_2, %c0_3] : memref<1x4x256xf32, #tpu.memory_space<vmem>>, vector<1x4x256xf32>
    %2 = vector.shape_cast %1 : vector<1x4x256xf32> to vector<4x256xf32>
    %cst = arith.constant dense<0.000000e+00> : vector<32x256xf32>
    %3 = tpu.matmul %0, %2, %cst {dimension_numbers = #tpu.dot_dimension_numbers<[1], [0], [0], [1], [0, 0, 1, 1], [], []>} : vector<32x4xf32>, vector<4x256xf32>, vector<32x256xf32> -> vector<32x256xf32>
    %c0_4 = arith.constant 0 : index
    %c0_5 = arith.constant 0 : index
    %4 = vector.load %arg3[%c0_4, %c0_5] : memref<8x1xf32, #tpu.memory_space<vmem>>, vector<8x1xf32>
    %5 = vector.extract_strided_slice %3 {offsets = [0, 0], sizes = [8, 256], strides = [1, 1]} : vector<32x256xf32> to vector<8x256xf32>
    %6 = vector.broadcast %4 : vector<8x1xf32> to vector<8x256xf32>
    %7 = arith.addf %5, %6 : vector<8x256xf32>
    %c0_6 = arith.constant 0 : index
    %c0_7 = arith.constant 0 : index
    %c0_8 = arith.constant 0 : index
    %c0_9 = arith.constant 0 : index
    %c0_10 = arith.constant 0 : index
    %8 = vector.load %arg4[%c0_6, %c0_7, %c0_8, %c0_9, %c0_10] : memref<1x2x2x8x256xf32, #tpu.memory_space<vmem>>, vector<1x1x1x8x256xf32>
    %9 = vector.shape_cast %8 : vector<1x1x1x8x256xf32> to vector<8x256xf32>
    %10 = vector.shape_cast %7 : vector<8x256xf32> to vector<1x1x1x8x256xf32>
    tpu.vector_store %arg4[%c0_6, %c0_7, %c0_8, %c0_9, %c0_10], %10 {strides = array<i32>} : memref<1x2x2x8x256xf32, #tpu.memory_space<vmem>>, vector<1x1x1x8x256xf32>,
    %11 = vector.extract_strided_slice %3 {offsets = [8, 0], sizes = [8, 256], strides = [1, 1]} : vector<32x256xf32> to vector<8x256xf32>
    %12 = vector.broadcast %4 : vector<8x1xf32> to vector<8x256xf32>
    %13 = arith.addf %11, %12 : vector<8x256xf32>
    %c0_11 = arith.constant 0 : index
    %c0_12 = arith.constant 0 : index
    %c1 = arith.constant 1 : index
    %c0_13 = arith.constant 0 : index
    %c0_14 = arith.constant 0 : index
    %14 = vector.load %arg4[%c0_11, %c0_12, %c1, %c0_13, %c0_14] : memref<1x2x2x8x256xf32, #tpu.memory_space<vmem>>, vector<1x1x1x8x256xf32>
    %15 = vector.shape_cast %14 : vector<1x1x1x8x256xf32> to vector<8x256xf32>
    %16 = vector.shape_cast %13 : vector<8x256xf32> to vector<1x1x1x8x256xf32>
    tpu.vector_store %arg4[%c0_11, %c0_12, %c1, %c0_13, %c0_14], %16 {strides = array<i32>} : memref<1x2x2x8x256xf32, #tpu.memory_space<vmem>>, vector<1x1x1x8x256xf32>,
    %17 = vector.extract_strided_slice %3 {offsets = [16, 0], sizes = [8, 256], strides = [1, 1]} : vector<32x256xf32> to vector<8x256xf32>
    %18 = vector.broadcast %4 : vector<8x1xf32> to vector<8x256xf32>
    %19 = arith.addf %17, %18 : vector<8x256xf32>
    %c0_15 = arith.constant 0 : index
    %c1_16 = arith.constant 1 : index
    %c0_17 = arith.constant 0 : index
    %c0_18 = arith.constant 0 : index
    %c0_19 = arith.constant 0 : index
    %20 = vector.load %arg4[%c0_15, %c1_16, %c0_17, %c0_18, %c0_19] : memref<1x2x2x8x256xf32, #tpu.memory_space<vmem>>, vector<1x1x1x8x256xf32>
    %21 = vector.shape_cast %20 : vector<1x1x1x8x256xf32> to vector<8x256xf32>
    %22 = vector.shape_cast %19 : vector<8x256xf32> to vector<1x1x1x8x256xf32>
    tpu.vector_store %arg4[%c0_15, %c1_16, %c0_17, %c0_18, %c0_19], %22 {strides = array<i32>} : memref<1x2x2x8x256xf32, #tpu.memory_space<vmem>>, vector<1x1x1x8x256xf32>,
    %23 = vector.extract_strided_slice %3 {offsets = [24, 0], sizes = [8, 256], strides = [1, 1]} : vector<32x256xf32> to vector<8x256xf32>
    %24 = vector.broadcast %4 : vector<8x1xf32> to vector<8x256xf32>
    %25 = arith.addf %23, %24 : vector<8x256xf32>
    %c0_20 = arith.constant 0 : index
    %c1_21 = arith.constant 1 : index
    %c1_22 = arith.constant 1 : index
    %c0_23 = arith.constant 0 : index
    %c0_24 = arith.constant 0 : index
    %26 = vector.load %arg4[%c0_20, %c1_21, %c1_22, %c0_23, %c0_24] : memref<1x2x2x8x256xf32, #tpu.memory_space<vmem>>, vector<1x1x1x8x256xf32>
    %27 = vector.shape_cast %26 : vector<1x1x1x8x256xf32> to vector<8x256xf32>
    %28 = vector.shape_cast %25 : vector<8x256xf32> to vector<1x1x1x8x256xf32>
    tpu.vector_store %arg4[%c0_20, %c1_21, %c1_22, %c0_23, %c0_24], %28 {strides = array<i32>} : memref<1x2x2x8x256xf32, #tpu.memory_space<vmem>>, vector<1x1x1x8x256xf32>,
    return
  }
  func.func @transform_0(%arg0: i32) -> (i32, i32, i32) {
    %c0_i32 = arith.constant 0 : i32
    %c0_i32_0 = arith.constant 0 : i32
    %c0_i32_1 = arith.constant 0 : i32
    return %arg0, %c0_i32, %c0_i32_0 : i32, i32, i32
  }
  func.func @transform_1(%arg0: i32) -> (i32, i32) {
    %c0_i32 = arith.constant 0 : i32
    %c0_i32_0 = arith.constant 0 : i32
    %c0_i32_1 = arith.constant 0 : i32
    return %c0_i32, %c0_i32_0 : i32, i32
  }
  func.func @transform_2(%arg0: i32) -> (i32, i32) {
    %c0_i32 = arith.constant 0 : i32
    %c0_i32_0 = arith.constant 0 : i32
    %c0_i32_1 = arith.constant 0 : i32
    return %c0_i32, %c0_i32_0 : i32, i32
  }
  func.func @transform_3(%arg0: i32) -> (i32, i32, i32, i32, i32) {
    %c0_i32 = arith.constant 0 : i32
    %c0_i32_0 = arith.constant 0 : i32
    %c0_i32_1 = arith.constant 0 : i32
    %c0_i32_2 = arith.constant 0 : i32
    %c0_i32_3 = arith.constant 0 : i32
    return %arg0, %c0_i32, %c0_i32_0, %c0_i32_1, %c0_i32_2 : i32, i32, i32, i32, i32
  }
}

</mosaic_0001>

<llo_original>
// kernel: tpu_custom_call.1
$region0: #{tpu_custom_call.1}
  #allocation0 [shape = 'u32[]', space=smem, size = 0x4, offset = 0x4, fixed_abs, tag = 'smem constant byte address 0x4 - core index']
  #allocation1 [shape = 'u32[72,128]{1,0:T(1,128)}', space=vmem, size = 0x9000, scoped, tag = 'internal scratch']
  %s0 = inlined_call_operand.vmem [shape: f32[2,4,256], index: 0, kind: input, shape index: {}]
  %s1 = inlined_call_operand.vmem [shape: f32[32,4], index: 1, kind: input, shape index: {}]
  %s2 = inlined_call_operand.vmem [shape: f32[8,1], index: 2, kind: input, shape index: {}]
  %s3 = inlined_call_operand.hbm [shape: f32[2,2,2,8,256], index: 3, kind: output, shape index: {}]
  %s4 = sld [smem:[#allocation0]]
  $region45: #{tpu_custom_call.1} parent=0
    _
  %s6 = ssub.s32 1, %s4
  %s7 = scalar_select 0, %s6, %s4
  $region1: #{tpu_custom_call.1} parent=0
    #allocation2 [shape = 'u8[65536]{0}', space=vmem, size = 0x10000, scoped, tag = 'output window, operand 0']
    #allocation3 [shape = 's32[2]{0}', space=sflag, size = 0x8, scoped, tag = 'scoped memory for tpu_custom_call.1']
    %8 = vsyncpa [#allocation3], 0
    %s9 = scalar_lea.sflag [#allocation3], 1
    %10 = vsyncpa %s9, 0
    loop: start=0, step=1, limit=4
    $region2: #{tpu_custom_call.1} parent=1 // loop_pre_header
      _
    $region3: #{tpu_custom_call.1} parent=1 // loop_header
      %s12 = sphi 0, %s16
      %p13 = scmp.ge.s32.totalorder %s12, 4
      %s22 = sphi 0, %s24
      %s25 = sphi 0, %s22
      %s26 = sphi 0, %s25
      %s42 = sphi 0, %s26
      %s46 = sphi 0, %s46
      %s48 = sphi 0, %s46
      %s49 = sphi 0, %s48
      %s63 = sphi 0, %s49
      %s67 = sphi 0, %s67
      %s69 = sphi 0, %s67
      %s70 = sphi 0, %s69
      %s84 = sphi 0, %s70
      %s90 = sphi 0, %s92
      %s93 = sphi 0, %s90
      %s94 = sphi 0, %s93
      %s110 = sphi 0, %s94
    $region4: #{tpu_custom_call.1} parent=1 // loop_header_branch
      %15 = sbr.rel (%p13) target = $region8
    $region5: #{tpu_custom_call.1} parent=1 // loop_body
      %s17 = ssub.s32 %s12, 1
      %s18 = ssub.s32 %s12, 2
      %s19 = sadd.s32 %s12, 1
      %s20 = ssub.s32 %s12, %s19
      %p21 = scmp.eq.s32.totalorder %s20, 0
      %s23 = sadd.s32 %s22, 1
      %s24 = scalar_select %p21, %s22, %s23
      %p27 = pneg %p21
      %p28 = scmp.eq.s32.totalorder %s12, 1
      %p29 = por %p27, %p28
      %p30 = scmp.ne.s32.totalorder %s22, %s25
      %p31 = scmp.eq.s32.totalorder %s12, 0
      %p32 = por %p30, %p31
      %p33 = scmp.ne.s32.totalorder %s22, %s25
      %p34 = scmp.eq.s32.totalorder %s17, 1
      %p35 = por %p33, %p34
      %p36 = scmp.ne.s32.totalorder %s25, %s26
      %p37 = scmp.eq.s32.totalorder %s17, 0
      %p38 = por %p36, %p37
      %p39 = scmp.ne.s32.totalorder %s25, %s26
      %p40 = scmp.eq.s32.totalorder %s18, 1
      %p41 = por %p39, %p40
      %p43 = scmp.ne.s32.totalorder %s26, %s42
      %p44 = scmp.eq.s32.totalorder %s18, 0
      %p45 = por %p43, %p44
      %s47 = sadd.s32 %s46, 1
      %p50 = scmp.eq.s32.totalorder %s12, 1
      %p51 = scmp.ne.s32.totalorder %s46, %s48
      %p52 = scmp.eq.s32.totalorder %s12, 0
      %p53 = por %p51, %p52
      %p54 = scmp.ne.s32.totalorder %s46, %s48
      %p55 = scmp.eq.s32.totalorder %s17, 1
      %p56 = por %p54, %p55
      %p57 = scmp.ne.s32.totalorder %s48, %s49
      %p58 = scmp.eq.s32.totalorder %s17, 0
      %p59 = por %p57, %p58
      %p60 = scmp.ne.s32.totalorder %s48, %s49
      %p61 = scmp.eq.s32.totalorder %s18, 1
      %p62 = por %p60, %p61
      %p64 = scmp.ne.s32.totalorder %s49, %s63
      %p65 = scmp.eq.s32.totalorder %s18, 0
      %p66 = por %p64, %p65
      %s68 = sadd.s32 %s67, 1
      %p71 = scmp.eq.s32.totalorder %s12, 1
      %p72 = scmp.ne.s32.totalorder %s67, %s69
      %p73 = scmp.eq.s32.totalorder %s12, 0
      %p74 = por %p72, %p73
      %p75 = scmp.ne.s32.totalorder %s67, %s69
      %p76 = scmp.eq.s32.totalorder %s17, 1
      %p77 = por %p75, %p76
      %p78 = scmp.ne.s32.totalorder %s69, %s70
      %p79 = scmp.eq.s32.totalorder %s17, 0
      %p80 = por %p78, %p79
      %p81 = scmp.ne.s32.totalorder %s69, %s70
      %p82 = scmp.eq.s32.totalorder %s18, 1
      %p83 = por %p81, %p82
      %p85 = scmp.ne.s32.totalorder %s70, %s84
      %p86 = scmp.eq.s32.totalorder %s18, 0
      %p87 = por %p85, %p86
      %s88 = ssub.s32 %s12, %s19
      %p89 = scmp.eq.s32.totalorder %s88, 0
      %s91 = sadd.s32 %s90, 1
      %s92 = scalar_select %p89, %s90, %s91
      %p95 = pneg %p89
      %p96 = scmp.eq.s32.totalorder %s12, 1
      %p97 = por %p95, %p96
      %p98 = scmp.ne.s32.totalorder %s90, %s93
      %p99 = scmp.eq.s32.totalorder %s12, 0
      %p100 = por %p98, %p99
      %p101 = scmp.ne.s32.totalorder %s90, %s93
      %p102 = scmp.eq.s32.totalorder %s17, 1
      %p103 = por %p101, %p102
      %p104 = scmp.ne.s32.totalorder %s93, %s94
      %p105 = scmp.eq.s32.totalorder %s17, 0
      %p106 = por %p104, %p105
      %p107 = scmp.ne.s32.totalorder %s93, %s94
      %p108 = scmp.eq.s32.totalorder %s18, 1
      %p109 = por %p107, %p108
      %p111 = scmp.ne.s32.totalorder %s94, %s110
      %p112 = scmp.eq.s32.totalorder %s18, 0
      %p113 = por %p111, %p112
      %p114 = scmp.le.s32.totalorder 1, %s12
      %p115 = scmp.lt.s32.totalorder %s12, 3
      %p116 = pnand %p114, %p115
      %p117 = pneg %p116
      // Predicated region
      $region9: #{tpu_custom_call.1} parent=5 // pred_check
        _
      $region10: #{tpu_custom_call.1} parent=5 // pred_check_branch
        %119 = sbr.rel (%p116) target = $region12
      $region11: #{tpu_custom_call.1} parent=5 // pred_region
        %s120 = ssub.s32 %s12, 1
        // Predicated region
        $region13: #{tpu_custom_call.1} parent=11 // pred_check
          %p121 = pneg %p59
        $region14: #{tpu_custom_call.1} parent=11 // pred_check_branch
          %123 = sbr.rel (%p121) target = $region16
        $region15: #{tpu_custom_call.1} parent=11 // pred_region
          _
        $region16: #{tpu_custom_call.1} parent=11 // pred_fallthru
          _
        // Predicated region
        $region17: #{tpu_custom_call.1} parent=11 // pred_check
          %p124 = pneg %p80
        $region18: #{tpu_custom_call.1} parent=11 // pred_check_branch
          %126 = sbr.rel (%p124) target = $region20
        $region19: #{tpu_custom_call.1} parent=11 // pred_region
          _
        $region20: #{tpu_custom_call.1} parent=11 // pred_fallthru
          _
      $region12: #{tpu_custom_call.1} parent=5 // pred_fallthru
        _
      %p127 = scmp.lt.s32.totalorder %s12, 2
      // Predicated region
      $region21: #{tpu_custom_call.1} parent=5 // pred_check
        %p128 = pneg %p127
      $region22: #{tpu_custom_call.1} parent=5 // pred_check_branch
        %130 = sbr.rel (%p128) target = $region24
      $region23: #{tpu_custom_call.1} parent=5 // pred_region
        // Predicated region
        $region25: #{tpu_custom_call.1} parent=23 // pred_check
          %p131 = pneg %p32
        $region26: #{tpu_custom_call.1} parent=23 // pred_check_branch
          %133 = sbr.rel (%p131) target = $region28
        $region27: #{tpu_custom_call.1} parent=23 // pred_region
          %p134 = scmp.lt.s32.totalorder %s12, 1
          %s135 = scalar_select %p134, %s12, 1
          %s136 = smul.addr %s135, 2
          %s137 = smul.addr %s136, 4
          %s138 = scalar_lea.vmem %s0, %s137
        $region28: #{tpu_custom_call.1} parent=23 // pred_fallthru
          _
      $region24: #{tpu_custom_call.1} parent=5 // pred_fallthru
        _
      %p139 = scmp.le.s32.totalorder 1, %s12
      %p140 = scmp.lt.s32.totalorder %s12, 3
      %p141 = pnand %p139, %p140
      %p142 = pneg %p141
      // Predicated region
      $region29: #{tpu_custom_call.1} parent=5 // pred_check
        _
      $region30: #{tpu_custom_call.1} parent=5 // pred_check_branch
        %144 = sbr.rel (%p141) target = $region32
      $region31: #{tpu_custom_call.1} parent=5 // pred_region
        %s145 = ssub.s32 %s12, 1
        %p146 = scmp.lt.s32.totalorder %s17, 1
        %s147 = scalar_select %p146, %s17, 1
        %s148 = smul.addr %s147, 2
        %s149 = smul.addr %s148, 4
        %s150 = scalar_lea.vmem %s0, %s149
        %p151 = pneg %p38
        %p152 = pneg %p35
        %p153 = pneg %p59
        %p154 = pneg %p56
        %p155 = pneg %p80
        %p156 = pneg %p77
        %p157 = pneg %p106
        %p158 = pneg %p103
        %s159 = sand.u32 %s93, 1
        %s160 = scalar_lea.sflag [#allocation3], %s159
        %s161 = sand.u32 %s93, 1
        %s162 = smul.addr %s161, 64
        %s163 = scalar_lea.vmem [#allocation2], %s162
        %p164 = scmp.lt.s32.totalorder %s17, 1
        %s165 = scalar_select %p164, %s17, 1
        %s166 = smul.addr %s165, 2
        %s167 = smul.addr %s166, 4
        %s168 = scalar_lea.vmem %s0, %s167
        %v169 = vld [vmem:[%s1] sm:$0xff]
        %v170 = vld [vmem:[%s1 + $0x8] sm:$0xff]
        %v171 = vld [vmem:[%s1 + $0x10] sm:$0xff]
        %v172 = vld [vmem:[%s1 + $0x18] sm:$0xff]
        %v173 = vld [vmem:[%s168] sm:$0xff]
        %175 = vst [vmem:[#allocation1] ss:$2 sm:$0xff] %v173
        %v176 = vld.sshfl [vmem:[#allocation1] sm:$0xff pattern:$0x75316420]
        %v177 = vld.sshfl [vmem:[#allocation1 + $0x8] sm:$0xff pattern:$0x75316420]
        %vm178 = vcmask 31744
        %v180 = vsel %vm178, %v169, 0
        %v183 = vsel %vm178, %v170, 0
        %v186 = vsel %vm178, %v171, 0
        %v189 = vsel %vm178, %v172, 0
        %vm191 = vcmask 1043456
        %v192 = vsel %vm191, %v176, 0
        %v194 = vsel %vm191, %v177, 0
        %196 = vmatpush.msra.mxu0 0.0
        %197 = vmatpush.msra.mxu0 0.0
        %198 = vmatpush.msra.mxu0 0.0
        %199 = vmatpush.msra.mxu0 0.0
        %200 = vmatpush.msra.mxu0 0.0
        %201 = vmatpush.msra.mxu0 0.0
        %202 = vmatpush.msra.mxu0 0.0
        %203 = vmatpush.msra.mxu0 0.0
        %204 = vmatpush.msra.mxu0 0.0
        %205 = vmatpush.msra.mxu0 0.0
        %206 = vmatpush.msra.mxu0 0.0
        %207 = vmatpush.msra.mxu0 0.0
        %208 = vmatpush.msra.mxu0 0.0
        %209 = vmatpush.msra.mxu0 0.0
        %210 = vmatpush.msra.mxu0 0.0
        %211 = vmatpush.msra.mxu0 %v192
        %212 = vmatmul.f32.gmra.mxu0 %v180
        %v213 = vpop.f32.mrf.mxu0
        %v214 = vadd.f32 0.0, %v213
        %215 = vmatmul.f32.gmra.mxu0 %v183
        %v216 = vpop.f32.mrf.mxu0
        %v217 = vadd.f32 0.0, %v216
        %218 = vmatmul.f32.gmra.mxu0 %v186
        %v219 = vpop.f32.mrf.mxu0
        %v220 = vadd.f32 0.0, %v219
        %221 = vmatmul.f32.gmra.mxu0 %v189
        %v222 = vpop.f32.mrf.mxu0
        %v223 = vadd.f32 0.0, %v222
        %224 = vdwg.mxu0
        %225 = vmatpush.msra.mxu0 0.0
        %226 = vmatpush.msra.mxu0 0.0
        %227 = vmatpush.msra.mxu0 0.0
        %228 = vmatpush.msra.mxu0 0.0
        %229 = vmatpush.msra.mxu0 0.0
        %230 = vmatpush.msra.mxu0 0.0
        %231 = vmatpush.msra.mxu0 0.0
        %232 = vmatpush.msra.mxu0 0.0
        %233 = vmatpush.msra.mxu0 0.0
        %234 = vmatpush.msra.mxu0 0.0
        %235 = vmatpush.msra.mxu0 0.0
        %236 = vmatpush.msra.mxu0 0.0
        %237 = vmatpush.msra.mxu0 0.0
        %238 = vmatpush.msra.mxu0 0.0
        %239 = vmatpush.msra.mxu0 0.0
        %240 = vmatpush.msra.mxu0 %v194
        %241 = vmatmul.f32.gmra.mxu0 %v180
        %v242 = vpop.f32.mrf.mxu0
        %v243 = vadd.f32 0.0, %v242
        %244 = vmatmul.f32.gmra.mxu0 %v183
        %v245 = vpop.f32.mrf.mxu0
        %v246 = vadd.f32 0.0, %v245
        %247 = vmatmul.f32.gmra.mxu0 %v186
        %v248 = vpop.f32.mrf.mxu0
        %v249 = vadd.f32 0.0, %v248
        %250 = vmatmul.f32.gmra.mxu0 %v189
        %v251 = vpop.f32.mrf.mxu0
        %v252 = vadd.f32 0.0, %v251
        %253 = vdwg.mxu0
        %v254 = vld [vmem:[%s2] sm:$0xff]
        %256 = vset.pattern.permute.xlu0 0
        %257 = vperm.xlu0 %256, %v254
        %v258 = vpop.permute.xlu0 %257
        %v260 = vadd.f32 %v214, %v258
        %v261 = vadd.f32 %v243, %v258
        %262 = vst [vmem:[%s163] sm:$0xff] %v260
        %263 = vst [vmem:[%s163 + $0x8] sm:$0xff] %v261
        %v264 = vadd.f32 %v217, %v258
        %v265 = vadd.f32 %v246, %v258
        %s266 = scalar_lea.vmem %s163, 16 [#allocation2]
        %267 = vst [vmem:[%s266] sm:$0xff] %v264
        %268 = vst [vmem:[%s266 + $0x8] sm:$0xff] %v265
        %v269 = vadd.f32 %v220, %v258
        %v270 = vadd.f32 %v249, %v258
        %s271 = scalar_lea.vmem %s163, 32 [#allocation2]
        %272 = vst [vmem:[%s271] sm:$0xff] %v269
        %273 = vst [vmem:[%s271 + $0x8] sm:$0xff] %v270
        %v274 = vadd.f32 %v223, %v258
        %v275 = vadd.f32 %v252, %v258
        %s276 = scalar_lea.vmem %s163, 48 [#allocation2]
        %277 = vst [vmem:[%s276] sm:$0xff] %v274
        %278 = vst [vmem:[%s276 + $0x8] sm:$0xff] %v275
        %s279 = sand.u32 %s93, 1
        %s280 = scalar_lea.sflag [#allocation3], %s279
        %s281 = sand.u32 %s93, 1
        %s282 = smul.addr %s281, 64
        %s283 = scalar_lea.vmem [#allocation2], %s282
        // Predicated region
        $region33: #{tpu_custom_call.1} parent=31 // pred_check
          %p284 = pneg %p103
        $region34: #{tpu_custom_call.1} parent=31 // pred_check_branch
          %286 = sbr.rel (%p284) target = $region36
        $region35: #{tpu_custom_call.1} parent=31 // pred_region
          %288 = vsyncadd %s280, 0
          %s289 = smul.addr %s17, 8
          %s290 = smul.addr %s289, 8
          %s291 = scalar_lea.hbm %s3, %s290
          %s292 = sshll.u32 %s283, 4
          %s293 = int_to_ptr.vmem [resolvable:$true] %s292
          %s294 = sshll.u32 %s291, 4
          %s295 = int_to_ptr.hbm [resolvable:$true] %s294
          %300 = dma.vmem_to_hbm [thread:$0]  %s293, 1024, %s295, %s280, 256, 256, 16
        $region36: #{tpu_custom_call.1} parent=31 // pred_fallthru
          _
      $region32: #{tpu_custom_call.1} parent=5 // pred_fallthru
        _
      %p301 = scmp.le.s32.totalorder 2, %s12
      // Predicated region
      $region37: #{tpu_custom_call.1} parent=5 // pred_check
        %p302 = pneg %p301
      $region38: #{tpu_custom_call.1} parent=5 // pred_check_branch
        %304 = sbr.rel (%p302) target = $region40
      $region39: #{tpu_custom_call.1} parent=5 // pred_region
        %s305 = ssub.s32 %s12, 2
        // Predicated region
        $region41: #{tpu_custom_call.1} parent=39 // pred_check
          %p306 = pneg %p109
        $region42: #{tpu_custom_call.1} parent=39 // pred_check_branch
          %308 = sbr.rel (%p306) target = $region44
        $region43: #{tpu_custom_call.1} parent=39 // pred_region
          %s309 = sand.u32 %s94, 1
          %s310 = scalar_lea.sflag [#allocation3], %s309
          %s311 = sand.u32 %s94, 1
          %s312 = smul.addr %s311, 64
          %s313 = scalar_lea.vmem [#allocation2], %s312
          %315 = dma.done %s310, 1024
        $region44: #{tpu_custom_call.1} parent=39 // pred_fallthru
          _
      $region40: #{tpu_custom_call.1} parent=5 // pred_fallthru
        _
    $region6: #{tpu_custom_call.1} parent=1 // loop_footer
      %s16 = sadd.s32 1, %s12
    $region7: #{tpu_custom_call.1} parent=1 // loop_footer_branch
      %11 = sbr.rel target = $region3
    $region8: #{tpu_custom_call.1} parent=1 // loop_exit
      _
    %316 = vsyncpa [#allocation3], 1
    %s317 = scalar_lea.sflag [#allocation3], 1
    %318 = vsyncpa %s317, 1

</llo_original>
